<compile_context>
chip_gen: v6e
topology: v6e:2x2x1
jax: 0.10.0
libtpu: 0.0.40
codegen_flags: <defaults>
</compile_context>

<pallas_src>
import functools
import math

import jax
import jax.numpy as jnp
import numpy as np
from jax import lax
from jax.experimental import pallas as pl
from jax.experimental.pallas import tpu as pltpu

_LANES = 128
_SUBLANES = 8
_F32_BYTES = 4

# VMEM tuning knobs -- conservative for all generations (v5e scoped default
# 16 MiB, v6e 32 MiB, v7x 32 MiB scoped / 64 MiB physical); we still raise the
# limit to 32 MiB explicitly so the compiler has headroom.
_VMEM_LIMIT_BYTES = 32 * 1024 * 1024
_PIPELINE_VMEM_BUDGET = 10 * 1024 * 1024   # streaming path: 2x out blk + 2x scratch
_RESIDENT_OUT_BUDGET = 8 * 1024 * 1024     # resident path: 2x out block
_MAX_RESIDENT_BYTES = 4 * 1024 * 1024      # whole-waveform-in-VMEM threshold
_MAX_VMEM_SAFETY = 24 * 1024 * 1024        # beyond this, fall back to gather
_MAX_LANE_PERIOD = 8                       # max per-period static unroll width
_MAX_STATIC_PERIODS = 8                    # static unroll vs fori_loop switch


def _cdiv(a, b):
    return -(-a // b)


def _round_up(a, b):
    return _cdiv(a, b) * b


def _round_down(a, b):
    return (a // b) * b


def _lcm(a, b):
    return a * b // math.gcd(a, b)


# ---------------------------------------------------------------------------
# Shared in-kernel copy of one group of R windows.
# ---------------------------------------------------------------------------
def _emit_group_copy(load_rows, out_ref, *, R, lane_period, step, rows_per_seg):
    """Copy R consecutive windows into the (R*rows_per_seg, 128) output block.

    `load_rows(row_start, n_rows)` returns (n_rows, 128) f32 rows of the
    source, where row_start is relative to this group's (row-aligned) start.
    Window j starts at sample j*step inside the group; its lane offset repeats
    with period `lane_period`, so the loop is (dynamic period) x (static
    lane_period) with fully static lane slicing for the unaligned assembly.
    """
    period_rows = (lane_period * step) // _LANES        # exact by construction
    out_rows_per_period = lane_period * rows_per_seg
    n_periods = R // lane_period

    def one_period(p):
        src_base = p * period_rows
        dst_base = p * out_rows_per_period
        if not isinstance(p, int):
            src_base = pl.multiple_of(src_base, period_rows)
            dst_base = pl.multiple_of(dst_base, out_rows_per_period)
        for q in range(lane_period):
            off = q * step                               # static
            r_off = off // _LANES                        # static
            lane_off = off % _LANES                      # static
            if lane_off == 0:
                rows = load_rows(src_base + r_off, rows_per_seg)
            else:
                # Window straddles lane boundaries: fetch one extra row and
                # stitch each output row from two adjacent input rows with
                # static lane slices + a lane-dim concat (XLU/VPU work that is
                # free in this copy-only kernel).
                slab = load_rows(src_base + r_off, rows_per_seg + 1)
                rows = jnp.concatenate(
                    [slab[:-1, lane_off:], slab[1:, :lane_off]], axis=1)
            out_ref[pl.ds(dst_base + q * rows_per_seg, rows_per_seg), :] = rows

    if n_periods <= _MAX_STATIC_PERIODS:
        for p in range(n_periods):
            one_period(p)
    else:
        # Large R: bound code size / vreg live ranges with a real loop.
        def body(p, carry):
            one_period(p)
            return carry

        lax.fori_loop(0, n_periods, body, 0, unroll=4)


# ---------------------------------------------------------------------------
# Kernel variants.
# ---------------------------------------------------------------------------
def _slice_resident_kernel(wave_ref, out_ref, *, R, lane_period, step,
                           rows_per_seg, group_rows):
    """Whole waveform resident in VMEM; each grid step emits one window group."""
    base = pl.multiple_of(pl.program_id(0) * group_rows, group_rows)
    _emit_group_copy(
        lambda s, n: wave_ref[pl.ds(base + s, n), :], out_ref,
        R=R, lane_period=lane_period, step=step, rows_per_seg=rows_per_seg)


def _slice_dma_kernel(wave_hbm, out_ref, buf, sem, *, R, lane_period, step,
                      rows_per_seg, group_rows, rows_in_tile):
    """Streaming variant: double-buffered HBM->VMEM DMA of each group's rows.

    wave_hbm : (n_rows_in, 128) f32 ref left in HBM (memory_space=pl.ANY)
    out_ref  : (R * rows_per_seg, 128) f32 VMEM output block for this group
    buf      : (2, rows_in_tile, 128) f32 VMEM double buffer
    sem      : (2,) DMA semaphores
    """
    g = pl.program_id(0)
    last = pl.num_programs(0) - 1

    def fetch(group, slot):
        base = group * group_rows
        if not isinstance(base, int):
            base = pl.multiple_of(base, group_rows)
        return pltpu.make_async_copy(
            wave_hbm.at[pl.ds(base, rows_in_tile), :], buf.at[slot],
            sem.at[slot])

    # Prime the pipeline at the first grid step (grid is "arbitrary", so every
    # step runs on the same core and the prime is guaranteed to happen first).
    @pl.when(g == 0)
    def _():
        fetch(0, 0).start()

    # Prefetch the next group's rows before consuming the current ones so the
    # HBM read of g+1 overlaps this step's copy + the pipelined output write.
    @pl.when(g < last)
    def _():
        fetch(g + 1, (g + 1) % 2).start()

    slot = g % 2
    fetch(g, slot).wait()

    _emit_group_copy(
        lambda s, n: buf[slot, pl.ds(s, n), :], out_ref,
        R=R, lane_period=lane_period, step=step, rows_per_seg=rows_per_seg)


# ---------------------------------------------------------------------------
# Planning + wrapper for the Pallas paths.
# ---------------------------------------------------------------------------
def _pallas_plan(segment_size, step, n_segments, max_resident_bytes,
                 vmem_budget_bytes):
    """Pick kernel variant and window-group size R. Returns None if unsupported."""
    if segment_size % _LANES != 0:
        return None
    rows_per_seg = segment_size // _LANES
    lane_period = _LANES // math.gcd(step, _LANES)
    if lane_period > _MAX_LANE_PERIOD:
        return None                     # odd step: inner unroll would explode
    # R must keep (a) the group start lane-aligned, (b) the output block an
    # 8-sublane multiple.
    align_req = _lcm(lane_period, _SUBLANES // math.gcd(rows_per_seg, _SUBLANES))

    seg_bytes = rows_per_seg * _LANES * _F32_BYTES
    step_row_bytes = _cdiv(step, _LANES) * _LANES * _F32_BYTES

    def rows_needed(n_windows):
        return _cdiv((n_windows - 1) * step + segment_size, _LANES)

    # --- resident variant: whole (padded) waveform stays in VMEM -------------
    n_pref = max(align_req, _round_down(_cdiv(n_segments, 4), align_req))
    r_budget = max(align_req, _round_down(
        _RESIDENT_OUT_BUDGET // max(1, 2 * seg_bytes), align_req))
    r_res = min(r_budget, n_pref, _round_up(n_segments, align_req))
    r_res = max(align_req, _round_down(r_res, align_req))
    n_groups_res = _cdiv(n_segments, r_res)
    resident_bytes = rows_needed(n_groups_res * r_res) * _LANES * _F32_BYTES
    if resident_bytes <= max_resident_bytes:
        if 2 * resident_bytes + 2 * r_res * seg_bytes <= _MAX_VMEM_SAFETY:
            return dict(kind="resident", R=r_res, rows_per_seg=rows_per_seg,
                        lane_period=lane_period)

    # --- streaming variant: manual double-buffered HBM->VMEM DMA -------------
    per_win = 2 * seg_bytes + 2 * step_row_bytes        # out blk x2 + scratch x2
    fixed = 2 * (seg_bytes + _LANES * _F32_BYTES)
    r_dma = max(align_req, _round_down(
        max(1, (vmem_budget_bytes - fixed) // per_win), align_req))
    r_dma = min(r_dma, _round_up(n_segments, align_req))
    r_dma = max(align_req, _round_down(r_dma, align_req))
    rows_in_tile = rows_needed(r_dma)
    vmem_est = 2 * r_dma * seg_bytes + 2 * rows_in_tile * _LANES * _F32_BYTES
    if vmem_est > _MAX_VMEM_SAFETY:
        return None
    return dict(kind="dma", R=r_dma, rows_per_seg=rows_per_seg,
                lane_period=lane_period)


def _frames_pallas(waveform, segment_size, step, n_segments, *,
                   max_resident_bytes, vmem_budget_bytes):
    """Overlapping windows, segment_size % 128 == 0. Returns None if unsupported."""
    plan = _pallas_plan(segment_size, step, n_segments, max_resident_bytes,
                        vmem_budget_bytes)
    if plan is None:
        return None
    R = plan["R"]
    rows_per_seg = plan["rows_per_seg"]
    lane_period = plan["lane_period"]

    n_groups = _cdiv(n_segments, R)
    n_win_padded = n_groups * R
    group_rows = (R * step) // _LANES                       # exact: R % lane_period == 0
    rows_in_tile = _cdiv((R - 1) * step + segment_size, _LANES)
    n_rows_in = _cdiv((n_win_padded - 1) * step + segment_size, _LANES)
    target_samples = n_rows_in * _LANES

    n_samples = waveform.shape[-1]
    if n_samples < target_samples:
        w = jnp.pad(waveform, ((0, 0), (0, target_samples - n_samples)))
    else:
        # Safe: target_samples >= (n_segments-1)*step + segment_size, so the
        # dropped tail is never read by any window.
        w = waveform[:, :target_samples]
    wave_rows = w.reshape(n_rows_in, _LANES)                # sublane-dense view

    out_rows_padded = n_win_padded * rows_per_seg
    out_shape = jax.ShapeDtypeStruct((out_rows_padded, _LANES), jnp.float32)
    out_block = pl.BlockSpec((R * rows_per_seg, _LANES), lambda g: (g, 0))

    if plan["kind"] == "resident":
        kernel = functools.partial(
            _slice_resident_kernel, R=R, lane_period=lane_period, step=step,
            rows_per_seg=rows_per_seg, group_rows=group_rows)
        frames = pl.pallas_call(
            kernel,
            out_shape=out_shape,
            grid=(n_groups,),
            in_specs=[pl.BlockSpec((n_rows_in, _LANES), lambda g: (0, 0))],
            out_specs=out_block,
            compiler_params=pltpu.CompilerParams(
                dimension_semantics=("parallel",),
                vmem_limit_bytes=_VMEM_LIMIT_BYTES),
        )(wave_rows)
    else:
        kernel = functools.partial(
            _slice_dma_kernel, R=R, lane_period=lane_period, step=step,
            rows_per_seg=rows_per_seg, group_rows=group_rows,
            rows_in_tile=rows_in_tile)
        frames = pl.pallas_call(
            kernel,
            out_shape=out_shape,
            grid=(n_groups,),
            in_specs=[pl.BlockSpec(memory_space=pl.ANY)],
            out_specs=out_block,
            scratch_shapes=[
                pltpu.VMEM((2, rows_in_tile, _LANES), jnp.float32),
                pltpu.SemaphoreType.DMA((2,)),
            ],
            compiler_params=pltpu.CompilerParams(
                # Cross-step DMA pipeline state -> must be "arbitrary".
                dimension_semantics=("arbitrary",),
                vmem_limit_bytes=_VMEM_LIMIT_BYTES),
        )(wave_rows)

    frames = frames.reshape(n_win_padded, segment_size)
    return frames[:n_segments]


# ---------------------------------------------------------------------------
# Non-Pallas paths.
# ---------------------------------------------------------------------------
def _frames_nonoverlapping(waveform, segment_size, step, n_segments):
    """step >= segment_size: framing is a reshape (+ column slice if step>seg)."""
    w = waveform[0]
    need = n_segments * step
    if w.shape[0] < need:
        w = jnp.pad(w, (0, need - w.shape[0]))
    frames = w[:need].reshape(n_segments, step)
    if step > segment_size:
        frames = frames[:, :segment_size]
    return frames


def _frames_gather(waveform, segment_size, step, n_segments):
    """Overlapping but Pallas-ineligible windows: XLA gather fallback."""
    # TODO(synk): segment_size % 128 != 0 or odd step sizes (lane period > 8)
    # use an XLA gather instead of the Pallas kernel.
    w = waveform[0]
    starts = jnp.arange(n_segments, dtype=jnp.int32) * step
    return jax.vmap(
        lambda s: jax.lax.dynamic_slice(w, (s,), (segment_size,)))(starts)


def _tail_row(waveform, end, segment_size):
    """The add_last row: waveform[:, end:] zero-padded to segment_size."""
    n_samples = waveform.shape[-1]
    tail_len = max(0, min(segment_size, n_samples - end))
    row = jnp.zeros((segment_size,), jnp.float32)
    if tail_len > 0:
        row = row.at[:tail_len].set(waveform[0, end:end + tail_len])
    return row


# ---------------------------------------------------------------------------
# Public entry point (matches the PyTorch module's forward).
# ---------------------------------------------------------------------------
def slice_audio(waveform, *, sr=16000, window_length=1, step_size=1,
                add_last=False,
                max_resident_bytes=_MAX_RESIDENT_BYTES,
                vmem_budget_bytes=_PIPELINE_VMEM_BUDGET):
    """JAX/Pallas equivalent of the PyTorch `slice_audio.forward`.

    waveform: (1, n_samples) array. Returns (n_segments[+1], segment_size) f32.
    """
    waveform = jnp.asarray(waveform, jnp.float32)
    assert waveform.ndim == 2 and waveform.shape[0] == 1, "expects (1, n_samples)"

    n_samples = waveform.shape[-1]
    segment_size = int(window_length * sr)
    step = int(step_size * sr)
    assert segment_size >= 1 and step >= 1
    n_segments = int(1 + (n_samples - segment_size) // step)
    # TODO(synk): the PyTorch n_segments == 0 + add_last special case (clip
    # shorter than one window) is not supported here.
    assert n_segments >= 1, "need at least one full segment"
    end = (n_segments - 1) * step + segment_size

    if step >= segment_size:
        # Non-overlapping frames: pure reshape, skip the kernel entirely.
        main = _frames_nonoverlapping(waveform, segment_size, step, n_segments)
    else:
        main = _frames_pallas(waveform, segment_size, step, n_segments,
                              max_resident_bytes=max_resident_bytes,
                              vmem_budget_bytes=vmem_budget_bytes)
        if main is None:
            main = _frames_gather(waveform, segment_size, step, n_segments)

    if add_last:
        tail = _tail_row(waveform, end, segment_size)
        return jnp.concatenate([main, tail[None, :]], axis=0)
    return main


def _reference(waveform, *, sr, window_length, step_size, add_last):
    """NumPy port of the PyTorch forward for verification."""
    waveform = np.asarray(waveform, np.float32)
    n_samples = waveform.shape[-1]
    segment_size = int(window_length * sr)
    step = int(step_size * sr)
    n_segments = int(1 + (n_samples - segment_size) // step)
    n_out = n_segments + 1 if add_last else n_segments
    out = np.zeros((n_out, segment_size), np.float32)
    end = 0
    for i in range(n_segments):
        start = i * step
        end = start + segment_size
        out[i] = waveform[0, start:end]
    if add_last:
        tail = waveform[0, end:]
        out[n_segments, : tail.shape[-1]] = tail
    return out


if __name__ == "__main__":
    key = jax.random.PRNGKey(0)
    configs = [
        # (name, sr, window_length, step_size, n_samples, overrides)
        # Overlapping, 128-aligned step: resident-input Pallas variant.
        ("pallas_resident_aligned", 1024, 1, 0.5, 8492, {}),
        # Same config forced onto the streaming double-buffered DMA variant
        # (small VMEM budget -> multiple grid steps exercise the prefetch).
        ("pallas_dma_aligned", 1024, 1, 0.5, 8492,
         dict(max_resident_bytes=0, vmem_budget_bytes=64 * 1024)),
        # Overlapping, step % 128 == 64 (same shape class as sr=16000,
        # step=8000): lane-unaligned windows assembled in-kernel.
        ("pallas_resident_lane64", 1024, 1, 0.5625, 8492, {}),
        ("pallas_dma_lane64", 1024, 1, 0.5625, 8492,
         dict(max_resident_bytes=0, vmem_budget_bytes=64 * 1024)),
        # Many small windows per group -> exercises the fori_loop copy path.
        ("pallas_resident_fori", 128, 2, 1, 7800, {}),
        # Non-overlapping default-style config: reshape fast path (no kernel).
        ("nonoverlap_fast", 1000, 1, 1, 3456, {}),
        # step > segment: fast path with column slice + padding.
        ("nonoverlap_gap", 100, 1, 1.5, 700, {}),
        # Overlapping but segment not 128-aligned: XLA gather fallback.
        ("gather_unaligned_segment", 100, 1, 0.5, 375, {}),
        # Odd step (lane period 128): falls back to the XLA gather.
        ("gather_odd_step", 1024, 1, 0.5126953125, 6000, {}),
    ]
    for name, sr, wl, ss, n, overrides in configs:
        key, sub = jax.random.split(key)
        wav = jax.random.normal(sub, (1, n), dtype=jnp.float32)
        for add_last in (False, True):
            out = slice_audio(wav, sr=sr, window_length=wl, step_size=ss,
                              add_last=add_last, **overrides)
            out = jax.block_until_ready(out)
            ref = _reference(np.asarray(wav), sr=sr, window_length=wl,
                             step_size=ss, add_last=add_last)
            np.testing.assert_allclose(np.asarray(out), ref, rtol=0, atol=0,
                                       err_msg=f"{name} add_last={add_last}")
    print("KERNEL_OK")
</pallas_src>

<mosaic_0001>
module attributes {stable_mosaic.version = 11 : i64} {
  func.func @_slice_resident_kernel(%arg0: i32, %arg1: memref<68x128xf32, #tpu.memory_space<vmem>>, %arg2: memref<32x128xf32, #tpu.memory_space<vmem>>) attributes {dimension_semantics = [#tpu.dimension_semantics<parallel>], iteration_bounds = array<i64: 4>, scalar_prefetch = 0 : i64, scratch_operands = 0 : i64, tpu.core_type = #tpu.core_type<tc>, window_params = [{pipeline_mode = #tpu.pipeline_mode<synchronous>, transform_indices = @transform_0, window_bounds = array<i64: 68, 128>}, {transform_indices = @transform_1, window_bounds = array<i64: 32, 128>}]} {
    %c16_i32 = arith.constant 16 : i32
    %0 = arith.muli %arg0, %c16_i32 : i32
    %1 = tpu.assume_multiple %0, 16 : i32
    %c0_i32 = arith.constant 0 : i32
    %2 = arith.addi %1, %c0_i32 : i32
    %3 = arith.index_cast %2 : i32 to index
    %c0 = arith.constant 0 : index
    %4 = vector.load %arg1[%3, %c0] : memref<68x128xf32, #tpu.memory_space<vmem>>, vector<8x128xf32>
    %c0_0 = arith.constant 0 : index
    %c0_1 = arith.constant 0 : index
    %5 = vector.load %arg2[%c0_0, %c0_1] : memref<32x128xf32, #tpu.memory_space<vmem>>, vector<8x128xf32>
    tpu.vector_store %arg2[%c0_0, %c0_1], %4 {strides = array<i32>} : memref<32x128xf32, #tpu.memory_space<vmem>>, vector<8x128xf32>,
    %c4_i32 = arith.constant 4 : i32
    %6 = arith.addi %1, %c4_i32 : i32
    %7 = arith.index_cast %6 : i32 to index
    %c0_2 = arith.constant 0 : index
    %8 = vector.load %arg1[%7, %c0_2] : memref<68x128xf32, #tpu.memory_space<vmem>>, vector<8x128xf32>
    %c8 = arith.constant 8 : index
    %c0_3 = arith.constant 0 : index
    %9 = vector.load %arg2[%c8, %c0_3] : memref<32x128xf32, #tpu.memory_space<vmem>>, vector<8x128xf32>
    tpu.vector_store %arg2[%c8, %c0_3], %8 {strides = array<i32>} : memref<32x128xf32, #tpu.memory_space<vmem>>, vector<8x128xf32>,
    %c8_i32 = arith.constant 8 : i32
    %10 = arith.addi %1, %c8_i32 : i32
    %11 = arith.index_cast %10 : i32 to index
    %c0_4 = arith.constant 0 : index
    %12 = vector.load %arg1[%11, %c0_4] : memref<68x128xf32, #tpu.memory_space<vmem>>, vector<8x128xf32>
    %c16 = arith.constant 16 : index
    %c0_5 = arith.constant 0 : index
    %13 = vector.load %arg2[%c16, %c0_5] : memref<32x128xf32, #tpu.memory_space<vmem>>, vector<8x128xf32>
    tpu.vector_store %arg2[%c16, %c0_5], %12 {strides = array<i32>} : memref<32x128xf32, #tpu.memory_space<vmem>>, vector<8x128xf32>,
    %c12_i32 = arith.constant 12 : i32
    %14 = arith.addi %1, %c12_i32 : i32
    %15 = arith.index_cast %14 : i32 to index
    %c0_6 = arith.constant 0 : index
    %16 = vector.load %arg1[%15, %c0_6] : memref<68x128xf32, #tpu.memory_space<vmem>>, vector<8x128xf32>
    %c24 = arith.constant 24 : index
    %c0_7 = arith.constant 0 : index
    %17 = vector.load %arg2[%c24, %c0_7] : memref<32x128xf32, #tpu.memory_space<vmem>>, vector<8x128xf32>
    tpu.vector_store %arg2[%c24, %c0_7], %16 {strides = array<i32>} : memref<32x128xf32, #tpu.memory_space<vmem>>, vector<8x128xf32>,
    return
  }
  func.func @transform_0(%arg0: i32) -> (i32, i32) {
    %c0_i32 = arith.constant 0 : i32
    %c0_i32_0 = arith.constant 0 : i32
    %c0_i32_1 = arith.constant 0 : i32
    return %c0_i32, %c0_i32_0 : i32, i32
  }
  func.func @transform_1(%arg0: i32) -> (i32, i32) {
    %c0_i32 = arith.constant 0 : i32
    %c0_i32_0 = arith.constant 0 : i32
    return %arg0, %c0_i32 : i32, i32
  }
}

</mosaic_0001>

<llo_original>
// kernel: tpu_custom_call.1
$region0: #{tpu_custom_call.1}
  #allocation0 [shape = 'u32[]', space=smem, size = 0x4, offset = 0x4, fixed_abs, tag = 'smem constant byte address 0x4 - core index']
  #allocation1 [shape = 'u32[144,128]{1,0:T(1,128)}', space=vmem, size = 0x12000, scoped, tag = 'internal scratch']
  %s0 = inlined_call_operand.hbm [shape: f32[68,128], index: 0, kind: input, shape index: {}]
  %s1 = inlined_call_operand.hbm [shape: f32[128,128], index: 1, kind: output, shape index: {}]
  %s2 = sld [smem:[#allocation0]]
  $region41: #{tpu_custom_call.1} parent=0
    _
  %s4 = ssub.s32 1, %s2
  %s5 = scalar_select 0, %s4, %s2
  $region1: #{tpu_custom_call.1} parent=0
    #allocation2 [shape = 'u8[36864]{0}', space=vmem, size = 0x9000, scoped, tag = 'input window, operand 0, single buffered']
    #allocation3 [shape = 's32[2]{0}', space=sflag, size = 0x8, scoped, tag = 'scoped memory for tpu_custom_call.1']
    #allocation4 [shape = 's32[2]{0}', space=sflag, size = 0x8, scoped, tag = 'scoped memory for tpu_custom_call.1']
    #allocation5 [shape = 'u8[32768]{0}', space=vmem, size = 0x8000, scoped, tag = 'output window, operand 0']
    %6 = vsyncpa [#allocation3], 0
    %7 = vsyncpa [#allocation4], 0
    %s8 = scalar_lea.sflag [#allocation4], 1
    %9 = vsyncpa %s8, 0
    loop: start=0, step=1, limit=6
    $region2: #{tpu_custom_call.1} parent=1 // loop_pre_header
      _
    $region3: #{tpu_custom_call.1} parent=1 // loop_header
      %s11 = sphi 0, %s15
      %p12 = scmp.ge.s32.totalorder %s11, 6
      %s19 = sphi 0, %s19
      %s21 = sphi 0, %s19
      %s22 = sphi 0, %s21
      %s36 = sphi 0, %s22
      %s42 = sphi 0, %s44
      %s45 = sphi 0, %s42
      %s46 = sphi 0, %s45
      %s62 = sphi 0, %s46
    $region4: #{tpu_custom_call.1} parent=1 // loop_header_branch
      %14 = sbr.rel (%p12) target = $region8
    $region5: #{tpu_custom_call.1} parent=1 // loop_body
      %s16 = ssub.s32 %s11, 1
      %s17 = ssub.s32 %s11, 2
      %s18 = sadd.s32 %s11, 1
      %s20 = sadd.s32 %s19, 1
      %p23 = scmp.eq.s32.totalorder %s11, 3
      %p24 = scmp.ne.s32.totalorder %s19, %s21
      %p25 = scmp.eq.s32.totalorder %s11, 0
      %p26 = por %p24, %p25
      %p27 = scmp.ne.s32.totalorder %s19, %s21
      %p28 = scmp.eq.s32.totalorder %s16, 3
      %p29 = por %p27, %p28
      %p30 = scmp.ne.s32.totalorder %s21, %s22
      %p31 = scmp.eq.s32.totalorder %s16, 0
      %p32 = por %p30, %p31
      %p33 = scmp.ne.s32.totalorder %s21, %s22
      %p34 = scmp.eq.s32.totalorder %s17, 3
      %p35 = por %p33, %p34
      %p37 = scmp.ne.s32.totalorder %s22, %s36
      %p38 = scmp.eq.s32.totalorder %s17, 0
      %p39 = por %p37, %p38
      %s40 = ssub.s32 %s11, %s18
      %p41 = scmp.eq.s32.totalorder %s40, 0
      %s43 = sadd.s32 %s42, 1
      %s44 = scalar_select %p41, %s42, %s43
      %p47 = pneg %p41
      %p48 = scmp.eq.s32.totalorder %s11, 3
      %p49 = por %p47, %p48
      %p50 = scmp.ne.s32.totalorder %s42, %s45
      %p51 = scmp.eq.s32.totalorder %s11, 0
      %p52 = por %p50, %p51
      %p53 = scmp.ne.s32.totalorder %s42, %s45
      %p54 = scmp.eq.s32.totalorder %s16, 3
      %p55 = por %p53, %p54
      %p56 = scmp.ne.s32.totalorder %s45, %s46
      %p57 = scmp.eq.s32.totalorder %s16, 0
      %p58 = por %p56, %p57
      %p59 = scmp.ne.s32.totalorder %s45, %s46
      %p60 = scmp.eq.s32.totalorder %s17, 3
      %p61 = por %p59, %p60
      %p63 = scmp.ne.s32.totalorder %s46, %s62
      %p64 = scmp.eq.s32.totalorder %s17, 0
      %p65 = por %p63, %p64
      %p66 = scmp.le.s32.totalorder 1, %s11
      %p67 = scmp.lt.s32.totalorder %s11, 5
      %p68 = pnand %p66, %p67
      %p69 = pneg %p68
      // Predicated region
      $region9: #{tpu_custom_call.1} parent=5 // pred_check
        _
      $region10: #{tpu_custom_call.1} parent=5 // pred_check_branch
        %71 = sbr.rel (%p68) target = $region12
      $region11: #{tpu_custom_call.1} parent=5 // pred_region
        %s72 = ssub.s32 %s11, 1
        // Predicated region
        $region13: #{tpu_custom_call.1} parent=11 // pred_check
          %p73 = pneg %p32
        $region14: #{tpu_custom_call.1} parent=11 // pred_check_branch
          %75 = sbr.rel (%p73) target = $region16
        $region15: #{tpu_custom_call.1} parent=11 // pred_region
          %s77 = ssub.s32 1152, 1152
          %78 = vsyncadd [#allocation3], %s77
          %s79 = sshll.u32 [#allocation2], 4
          %s80 = int_to_ptr.vmem [resolvable:$true] %s79
          %85 = dma.hbm_to_vmem [thread:$0]  %s0, 1152, %s80, [#allocation3], 128, 128, 8
        $region16: #{tpu_custom_call.1} parent=11 // pred_fallthru
          _
      $region12: #{tpu_custom_call.1} parent=5 // pred_fallthru
        _
      %p86 = scmp.lt.s32.totalorder %s11, 4
      // Predicated region
      $region17: #{tpu_custom_call.1} parent=5 // pred_check
        %p87 = pneg %p86
      $region18: #{tpu_custom_call.1} parent=5 // pred_check_branch
        %89 = sbr.rel (%p87) target = $region20
      $region19: #{tpu_custom_call.1} parent=5 // pred_region
        _
      $region20: #{tpu_custom_call.1} parent=5 // pred_fallthru
        _
      %p90 = scmp.le.s32.totalorder 1, %s11
      %p91 = scmp.lt.s32.totalorder %s11, 5
      %p92 = pnand %p90, %p91
      %p93 = pneg %p92
      // Predicated region
      $region21: #{tpu_custom_call.1} parent=5 // pred_check
        _
      $region22: #{tpu_custom_call.1} parent=5 // pred_check_branch
        %95 = sbr.rel (%p92) target = $region24
      $region23: #{tpu_custom_call.1} parent=5 // pred_region
        %s96 = ssub.s32 %s11, 1
        // Predicated region
        $region25: #{tpu_custom_call.1} parent=23 // pred_check
          %p97 = pneg %p32
        $region26: #{tpu_custom_call.1} parent=23 // pred_check_branch
          %99 = sbr.rel (%p97) target = $region28
        $region27: #{tpu_custom_call.1} parent=23 // pred_region
          %100 = dma.done [#allocation3], 1152
        $region28: #{tpu_custom_call.1} parent=23 // pred_fallthru
          _
        %p101 = pneg %p32
        %p102 = pneg %p29
        %p103 = pneg %p58
        %p104 = pneg %p55
        %s105 = sand.u32 %s45, 1
        %s106 = scalar_lea.sflag [#allocation4], %s105
        %s107 = sand.u32 %s45, 1
        %s108 = smul.addr %s107, 32
        %s109 = scalar_lea.vmem [#allocation5], %s108
        %s110 = smul.u32 4, %s16
        %s111 = smul.u32 %s16, 16
        %s112 = scalar_lea.vmem [#allocation2], %s111
        %v113 = vld [vmem:[%s112] sm:$0xff]
        %114 = vst [vmem:[%s109] sm:$0xff] %v113
        %s115 = sadd.s32 %s111, 4
        %s116 = scalar_lea.vmem [#allocation2], %s115
        %v117 = vld [vmem:[%s116] sm:$0xff]
        %118 = vst [vmem:[%s109 + $0x8] sm:$0xff] %v117
        %s119 = sadd.s32 %s111, 8
        %s120 = scalar_lea.vmem [#allocation2], %s119
        %v121 = vld [vmem:[%s120] sm:$0xff]
        %122 = vst [vmem:[%s109 + $0x10] sm:$0xff] %v121
        %s123 = sadd.s32 %s111, 12
        %s124 = scalar_lea.vmem [#allocation2], %s123
        %v125 = vld [vmem:[%s124] sm:$0xff]
        %126 = vst [vmem:[%s109 + $0x18] sm:$0xff] %v125
        %s127 = sand.u32 %s45, 1
        %s128 = scalar_lea.sflag [#allocation4], %s127
        %s129 = sand.u32 %s45, 1
        %s130 = smul.addr %s129, 32
        %s131 = scalar_lea.vmem [#allocation5], %s130
        // Predicated region
        $region29: #{tpu_custom_call.1} parent=23 // pred_check
          %p132 = pneg %p55
        $region30: #{tpu_custom_call.1} parent=23 // pred_check_branch
          %134 = sbr.rel (%p132) target = $region32
        $region31: #{tpu_custom_call.1} parent=23 // pred_region
          %s135 = smul.u32 4, %s16
          %s137 = ssub.s32 512, 512
          %138 = vsyncadd %s128, %s137
          %s139 = smul.addr %s135, 128
          %s140 = scalar_lea.hbm %s1, %s139
          %s141 = sshll.u32 %s131, 4
          %s142 = int_to_ptr.vmem [resolvable:$true] %s141
          %147 = dma.vmem_to_hbm [thread:$0]  %s142, 512, %s140, %s128, 128, 128, 8
        $region32: #{tpu_custom_call.1} parent=23 // pred_fallthru
          _
      $region24: #{tpu_custom_call.1} parent=5 // pred_fallthru
        _
      %p148 = scmp.le.s32.totalorder 2, %s11
      // Predicated region
      $region33: #{tpu_custom_call.1} parent=5 // pred_check
        %p149 = pneg %p148
      $region34: #{tpu_custom_call.1} parent=5 // pred_check_branch
        %151 = sbr.rel (%p149) target = $region36
      $region35: #{tpu_custom_call.1} parent=5 // pred_region
        %s152 = ssub.s32 %s11, 2
        // Predicated region
        $region37: #{tpu_custom_call.1} parent=35 // pred_check
          %p153 = pneg %p61
        $region38: #{tpu_custom_call.1} parent=35 // pred_check_branch
          %155 = sbr.rel (%p153) target = $region40
        $region39: #{tpu_custom_call.1} parent=35 // pred_region
          %s156 = sand.u32 %s46, 1
          %s157 = scalar_lea.sflag [#allocation4], %s156
          %s158 = sand.u32 %s46, 1
          %s159 = smul.addr %s158, 32
          %s160 = scalar_lea.vmem [#allocation5], %s159
          %161 = dma.done %s157, 512
        $region40: #{tpu_custom_call.1} parent=35 // pred_fallthru
          _
      $region36: #{tpu_custom_call.1} parent=5 // pred_fallthru
        _
    $region6: #{tpu_custom_call.1} parent=1 // loop_footer
      %s15 = sadd.s32 1, %s11
    $region7: #{tpu_custom_call.1} parent=1 // loop_footer_branch
      %10 = sbr.rel target = $region3
    $region8: #{tpu_custom_call.1} parent=1 // loop_exit
      _
    %162 = vsyncpa [#allocation3], 1
    %s163 = scalar_lea.sflag [#allocation3], 1
    %164 = vsyncpa %s163, 1
    %165 = vsyncpa [#allocation4], 1
    %s166 = scalar_lea.sflag [#allocation4], 1
    %167 = vsyncpa %s166, 1

</llo_original>
